<compile_context>
chip_gen: v7x
topology: tpu7x:2x2x1
jax: 0.10.0
libtpu: 0.0.40
codegen_flags: <defaults>
</compile_context>

<pallas_src>
import functools
from math import comb

import jax
import jax.numpy as jnp
from jax.experimental import pallas as pl
from jax.experimental.pallas import tpu as pltpu


def _abs_pow(diff, p: int):
    # even p: no abs needed, integer_pow only (pure VPU); odd p: abs then integer_pow.
    if p % 2 == 0:
        return diff ** p
    return jnp.abs(diff) ** p


# -----------------------------------------------------------------------------------
# Kernel A: the whole batch fits one VMEM tile -> grid only over the feature axis.
# Per feature tile: per-lane |central-moment difference|^p, lane-dense (1, TD) store.
# -----------------------------------------------------------------------------------
def _cmd_k_single_kernel(a_ref, b_ref, out_ref, *, K: int, p: int):
    a = a_ref[...].astype(jnp.float32)            # (N, TD)
    b = b_ref[...].astype(jnp.float32)

    mean_a = jnp.mean(a, axis=0, keepdims=True)   # (1, TD)
    mean_b = jnp.mean(b, axis=0, keepdims=True)

    if K == 1:
        diff = mean_a - mean_b
    else:
        cm_a = jnp.mean((a - mean_a) ** K, axis=0, keepdims=True)   # integer_pow
        cm_b = jnp.mean((b - mean_b) ** K, axis=0, keepdims=True)
        diff = cm_a - cm_b

    out_ref[...] = _abs_pow(diff, p)              # (1, TD) unmasked lane-dense store


# -----------------------------------------------------------------------------------
# Kernel B: batch too large for one tile -> extra "arbitrary" batch axis (innermost).
# Accumulates raw moments sum(x^j), j=1..K, in VMEM scratch; the pl.when finalize forms
# central moments via the binomial expansion and writes the lane-dense contribution.
# -----------------------------------------------------------------------------------
def _cmd_k_moments_kernel(a_ref, b_ref, out_ref, sa_ref, sb_ref, *,
                          K: int, p: int, n_total: int, block_n: int):
    ni = pl.program_id(1)                         # batch-tile index (innermost grid axis)

    @pl.when(ni == 0)
    def _():
        sa_ref[...] = jnp.zeros_like(sa_ref)
        sb_ref[...] = jnp.zeros_like(sb_ref)

    a = a_ref[...].astype(jnp.float32)            # (block_n, TD)
    b = b_ref[...].astype(jnp.float32)

    if n_total % block_n != 0:
        # Mask out padded rows of the ragged last batch tile (they must not pollute sums).
        row = jax.lax.broadcasted_iota(jnp.int32, a.shape, 0) + ni * block_n
        valid = row < n_total
        a = jnp.where(valid, a, 0.0)
        b = jnp.where(valid, b, 0.0)

    pa, pb = a, b
    for j in range(K):                            # accumulate per-column sum(x^(j+1))
        sa_ref[pl.ds(j, 1), :] += jnp.sum(pa, axis=0, keepdims=True)
        sb_ref[pl.ds(j, 1), :] += jnp.sum(pb, axis=0, keepdims=True)
        if j + 1 < K:
            pa = pa * a
            pb = pb * b

    @pl.when(ni == pl.num_programs(1) - 1)
    def _():
        inv_n = 1.0 / float(n_total)
        if K == 1:
            diff = (sa_ref[pl.ds(0, 1), :] - sb_ref[pl.ds(0, 1), :]) * inv_n
        else:
            def central(s_ref):
                m = [s_ref[pl.ds(j, 1), :] * inv_n for j in range(K)]   # E[x^(j+1)]
                mu = m[0]
                cm = jnp.zeros_like(mu)
                # E[(x-mu)^K] = sum_i C(K,i) * (-mu)^(K-i) * E[x^i],  E[x^0] = 1
                for i in range(K + 1):
                    coef = comb(K, i) * ((-1.0) ** (K - i))
                    term = coef * (mu ** (K - i))
                    if i >= 1:
                        term = term * m[i - 1]
                    cm = cm + term
                return cm

            diff = central(sa_ref) - central(sb_ref)
        out_ref[...] = _abs_pow(diff, p)


# -----------------------------------------------------------------------------------
# Generation-aware, temp-aware tile selection.
# -----------------------------------------------------------------------------------
def _hw_budgets():
    """Returns (input_budget_bytes, vmem_limit_bytes, prefer_two_feature_tiles)."""
    try:
        vmem_cap = int(getattr(pltpu.get_tpu_info(), "vmem_capacity_bytes", 64 * 2**20))
    except Exception:
        vmem_cap = 64 * 2**20                     # conservative (v7x-sized) fallback
    if vmem_cap <= 80 * 2**20:                    # v7x: 64 MiB per TensorCore, 2 TCs
        return 36 * 2**20, 48 * 2**20, True
    return 56 * 2**20, 100 * 2**20, False         # v5e / v6e: 128 MiB physical VMEM


def _select_blocks(N, D, itemsize, input_budget_bytes, prefer_two_feature_tiles):
    d_units = max(1, pl.cdiv(D, 128))
    # Per (row, 128-lane) unit: 2 inputs * 2 pipeline buffers * itemsize of input bytes,
    # plus ~12 B of live f32 compute temporaries (astype upcasts, centered powers).
    per_row_unit = 128 * (4 * itemsize + 12)

    if N * per_row_unit <= input_budget_bytes:
        block_n = N                               # whole batch resident -> kernel A
    else:
        block_n = 512                             # kernel B (batch grid axis), 8-aligned

    bu = max(1, min(d_units, input_budget_bytes // (block_n * per_row_unit)))
    if prefer_two_feature_tiles and d_units >= 2:
        bu = min(bu, pl.cdiv(d_units, 2))         # >= 2 feature tiles for v7x megacore
    block_d = D if bu >= d_units else bu * 128    # full-extent block if a single tile
    return block_n, block_d


def cmd_k_loss(input_a, input_b, *, K: int = 1, p: int = 2, block_n=None, block_d=None):
    assert K > 0 and p > 0
    assert input_a.shape == input_b.shape and input_a.ndim == 2
    N, D = input_a.shape
    itemsize = max(jnp.dtype(input_a.dtype).itemsize, jnp.dtype(input_b.dtype).itemsize)

    input_budget, vmem_limit, prefer_two = _hw_budgets()
    auto_n, auto_d = _select_blocks(N, D, itemsize, input_budget, prefer_two)
    block_n = auto_n if block_n is None else min(block_n, N)
    block_d = auto_d if block_d is None else block_d

    num_d = pl.cdiv(D, block_d)
    use_batch_grid = block_n < N

    if not use_batch_grid:
        # TODO(synk): on v5e with many small feature tiles, pipeline_mode=pl.Buffered(3)
        # on the input BlockSpecs would further hide DMA latency; left out to stay lean.
        kernel = functools.partial(_cmd_k_single_kernel, K=K, p=p)
        partials = pl.pallas_call(
            kernel,
            out_shape=jax.ShapeDtypeStruct((1, D), jnp.float32),
            grid_spec=pltpu.PrefetchScalarGridSpec(
                num_scalar_prefetch=0,
                grid=(num_d,),
                in_specs=[pl.BlockSpec((N, block_d), lambda j: (0, j)),
                          pl.BlockSpec((N, block_d), lambda j: (0, j))],
                out_specs=pl.BlockSpec((1, block_d), lambda j: (0, j)),
            ),
            compiler_params=pltpu.CompilerParams(
                dimension_semantics=("parallel",),       # independent feature tiles
                vmem_limit_bytes=vmem_limit,
            ),
        )(input_a, input_b)
    else:
        assert block_n % 8 == 0, "batch tile must be sublane (8) aligned"
        num_n = pl.cdiv(N, block_n)
        kernel = functools.partial(_cmd_k_moments_kernel, K=K, p=p,
                                   n_total=N, block_n=block_n)
        partials = pl.pallas_call(
            kernel,
            out_shape=jax.ShapeDtypeStruct((1, D), jnp.float32),
            grid_spec=pltpu.PrefetchScalarGridSpec(
                num_scalar_prefetch=0,
                grid=(num_d, num_n),                     # reduction (batch) axis innermost
                in_specs=[pl.BlockSpec((block_n, block_d), lambda d, n: (n, d)),
                          pl.BlockSpec((block_n, block_d), lambda d, n: (n, d))],
                out_specs=pl.BlockSpec((1, block_d), lambda d, n: (0, d)),
                scratch_shapes=[pltpu.VMEM((K, block_d), jnp.float32),
                                pltpu.VMEM((K, block_d), jnp.float32)],
            ),
            compiler_params=pltpu.CompilerParams(
                dimension_semantics=("parallel", "arbitrary"),
                vmem_limit_bytes=vmem_limit,
            ),
        )(input_a, input_b)

    total = jnp.sum(partials)
    if p == 1:
        return total
    if p == 2:
        return jnp.sqrt(total)
    return total ** (1.0 / p)


def _cmd_k_ref(a, b, *, K, p):
    """Plain-JAX reference mirroring the PyTorch module (f32 compute)."""
    a = a.astype(jnp.float32)
    b = b.astype(jnp.float32)
    mean_a = jnp.mean(a, axis=0, keepdims=True)
    mean_b = jnp.mean(b, axis=0, keepdims=True)
    if K == 1:
        d = mean_a - mean_b
    else:
        d = jnp.mean((a - mean_a) ** K, axis=0) - jnp.mean((b - mean_b) ** K, axis=0)
    return jnp.sum(jnp.abs(d) ** p) ** (1.0 / p)


if __name__ == "__main__":
    key = jax.random.PRNGKey(0)
    ka, kb, ka2, kb2 = jax.random.split(key, 4)

    # Small shapes consistent with the module: batch=8, features=256.
    N, D = 8, 256
    input_a = jax.random.normal(ka, (N, D), dtype=jnp.float32)
    input_b = jax.random.normal(kb, (N, D), dtype=jnp.float32) + 0.5

    # K=1, p=2 (module defaults) — resident-batch (kernel A) path.
    loss1 = cmd_k_loss(input_a, input_b, K=1, p=2)
    jax.block_until_ready(loss1)
    assert jnp.allclose(loss1, _cmd_k_ref(input_a, input_b, K=1, p=2), rtol=1e-5, atol=1e-5)

    # K=2, p=2 (central-moment branch, even-p no-abs fast path).
    loss2 = cmd_k_loss(input_a, input_b, K=2, p=2)
    jax.block_until_ready(loss2)
    assert jnp.allclose(loss2, _cmd_k_ref(input_a, input_b, K=2, p=2), rtol=1e-5, atol=1e-5)

    # K=3, p=1 (odd-p / abs branch, p==1 root fast path).
    loss3 = cmd_k_loss(input_a, input_b, K=3, p=1)
    jax.block_until_ready(loss3)
    assert jnp.allclose(loss3, _cmd_k_ref(input_a, input_b, K=3, p=1), rtol=1e-5, atol=1e-5)

    # bf16 inputs (halves HBM traffic); compute is still f32 in-kernel.
    a_bf16 = input_a.astype(jnp.bfloat16)
    b_bf16 = input_b.astype(jnp.bfloat16)
    loss4 = cmd_k_loss(a_bf16, b_bf16, K=2, p=2)
    jax.block_until_ready(loss4)
    assert jnp.allclose(loss4, _cmd_k_ref(a_bf16, b_bf16, K=2, p=2), rtol=1e-4, atol=1e-4)

    # Batch-grid (kernel B, raw-moment accumulation) path exercised at small shapes:
    # ragged batch (N=20, block_n=8 -> masked last tile) and ragged features (D=200, block_d=128).
    N2, D2 = 20, 200
    a2 = jax.random.normal(ka2, (N2, D2), dtype=jnp.float32)
    b2 = jax.random.normal(kb2, (N2, D2), dtype=jnp.float32) + 0.25

    loss5 = cmd_k_loss(a2, b2, K=1, p=2, block_n=8, block_d=128)
    jax.block_until_ready(loss5)
    assert jnp.allclose(loss5, _cmd_k_ref(a2, b2, K=1, p=2), rtol=1e-4, atol=1e-4)

    loss6 = cmd_k_loss(a2, b2, K=3, p=2, block_n=8, block_d=128)
    jax.block_until_ready(loss6)
    assert jnp.allclose(loss6, _cmd_k_ref(a2, b2, K=3, p=2), rtol=1e-4, atol=1e-4)

    print("KERNEL_OK")
</pallas_src>

<mosaic_0001>
module attributes {stable_mosaic.version = 11 : i64} {
  func.func @_cmd_k_single_kernel(%arg0: i32, %arg1: memref<8x128xf32, #tpu.memory_space<vmem>>, %arg2: memref<8x128xf32, #tpu.memory_space<vmem>>, %arg3: memref<1x128xf32, #tpu.memory_space<vmem>>) attributes {dimension_semantics = [#tpu.dimension_semantics<parallel>], iteration_bounds = array<i64: 2>, scalar_prefetch = 0 : i64, scratch_operands = 0 : i64, tpu.core_type = #tpu.core_type<tc>, window_params = [{transform_indices = @transform_0, window_bounds = array<i64: 8, 128>}, {transform_indices = @transform_1, window_bounds = array<i64: 8, 128>}, {transform_indices = @transform_2, window_bounds = array<i64: 1, 128>}]} {
    %c0 = arith.constant 0 : index
    %c0_0 = arith.constant 0 : index
    %0 = vector.load %arg1[%c0, %c0_0] : memref<8x128xf32, #tpu.memory_space<vmem>>, vector<8x128xf32>
    %c0_1 = arith.constant 0 : index
    %c0_2 = arith.constant 0 : index
    %1 = vector.load %arg2[%c0_1, %c0_2] : memref<8x128xf32, #tpu.memory_space<vmem>>, vector<8x128xf32>
    %cst = arith.constant dense<0.000000e+00> : vector<128xf32>
    %2 = vector.multi_reduction <add>, %0, %cst [0] : vector<8x128xf32> to vector<128xf32>
    %3 = vector.shape_cast %2 : vector<128xf32> to vector<1x128xf32>
    %cst_3 = arith.constant 8.000000e+00 : f32
    %4 = vector.broadcast %cst_3 : f32 to vector<1x128xf32>
    %5 = arith.divf %3, %4 : vector<1x128xf32>
    %cst_4 = arith.constant dense<0.000000e+00> : vector<128xf32>
    %6 = vector.multi_reduction <add>, %1, %cst_4 [0] : vector<8x128xf32> to vector<128xf32>
    %7 = vector.shape_cast %6 : vector<128xf32> to vector<1x128xf32>
    %cst_5 = arith.constant 8.000000e+00 : f32
    %8 = vector.broadcast %cst_5 : f32 to vector<1x128xf32>
    %9 = arith.divf %7, %8 : vector<1x128xf32>
    %10 = arith.subf %5, %9 : vector<1x128xf32>
    %11 = arith.mulf %10, %10 : vector<1x128xf32>
    %c0_6 = arith.constant 0 : index
    %c0_7 = arith.constant 0 : index
    %12 = vector.load %arg3[%c0_6, %c0_7] : memref<1x128xf32, #tpu.memory_space<vmem>>, vector<1x128xf32>
    tpu.vector_store %arg3[%c0_6, %c0_7], %11 {strides = array<i32>} : memref<1x128xf32, #tpu.memory_space<vmem>>, vector<1x128xf32>,
    return
  }
  func.func @transform_0(%arg0: i32) -> (i32, i32) {
    %c0_i32 = arith.constant 0 : i32
    %c0_i32_0 = arith.constant 0 : i32
    return %c0_i32, %arg0 : i32, i32
  }
  func.func @transform_1(%arg0: i32) -> (i32, i32) {
    %c0_i32 = arith.constant 0 : i32
    %c0_i32_0 = arith.constant 0 : i32
    return %c0_i32, %arg0 : i32, i32
  }
  func.func @transform_2(%arg0: i32) -> (i32, i32) {
    %c0_i32 = arith.constant 0 : i32
    %c0_i32_0 = arith.constant 0 : i32
    return %c0_i32, %arg0 : i32, i32
  }
}

</mosaic_0001>

<llo_original>
// kernel: tpu_custom_call.1
$region0: #{tpu_custom_call.1}
  #allocation0 [shape = 'u32[]', space=smem, size = 0x4, offset = 0x4, fixed_abs, tag = 'smem constant byte address 0x4 - core index']
  #allocation1 [shape = 'u32[144,128]{1,0:T(1,128)}', space=vmem, size = 0x12000, scoped, tag = 'internal scratch']
  %s0 = inlined_call_operand.hbm [shape: f32[8,256], index: 0, kind: input, shape index: {}]
  %s1 = inlined_call_operand.hbm [shape: f32[8,256], index: 1, kind: input, shape index: {}]
  %s2 = inlined_call_operand.hbm [shape: f32[1,256], index: 2, kind: output, shape index: {}]
  %s3 = sld [smem:[#allocation0]]
  $region49: #{tpu_custom_call.1} parent=0
    _
  %s5 = ssub.s32 1, %s3
  %s6 = scalar_select 0, %s5, %s3
  $region1: #{tpu_custom_call.1} parent=0
    #allocation2 [shape = 'u8[8192]{0}', space=vmem, size = 0x2000, scoped, tag = 'input window, operand 0']
    #allocation3 [shape = 's32[2]{0}', space=sflag, size = 0x8, scoped, tag = 'scoped memory for tpu_custom_call.1']
    #allocation4 [shape = 's32[2]{0}', space=sflag, size = 0x8, scoped, tag = 'scoped memory for tpu_custom_call.1']
    #allocation5 [shape = 'u8[8192]{0}', space=vmem, size = 0x2000, scoped, tag = 'input window, operand 1']
    #allocation6 [shape = 's32[2]{0}', space=sflag, size = 0x8, scoped, tag = 'scoped memory for tpu_custom_call.1']
    #allocation7 [shape = 'u8[1024]{0}', space=vmem, size = 0x400, scoped, tag = 'output window, operand 0']
    %7 = vsyncpa [#allocation3], 0
    %s8 = scalar_lea.sflag [#allocation3], 1
    %9 = vsyncpa %s8, 0
    %10 = vsyncpa [#allocation6], 0
    %s11 = scalar_lea.sflag [#allocation6], 1
    %12 = vsyncpa %s11, 0
    %13 = vsyncpa [#allocation4], 0
    %s14 = scalar_lea.sflag [#allocation4], 1
    %15 = vsyncpa %s14, 0
    loop: start=0, step=1, limit=4
    $region2: #{tpu_custom_call.1} parent=1 // loop_pre_header
      _
    $region3: #{tpu_custom_call.1} parent=1 // loop_header
      %s17 = sphi 0, %s21
      %p18 = scmp.ge.s32.totalorder %s17, 4
      %s27 = sphi 0, %s29
      %s30 = sphi 0, %s27
      %s31 = sphi 0, %s30
      %s47 = sphi 0, %s31
      %s53 = sphi 0, %s55
      %s56 = sphi 0, %s53
      %s57 = sphi 0, %s56
      %s73 = sphi 0, %s57
      %s79 = sphi 0, %s81
      %s82 = sphi 0, %s79
      %s83 = sphi 0, %s82
      %s99 = sphi 0, %s83
    $region4: #{tpu_custom_call.1} parent=1 // loop_header_branch
      %20 = sbr.rel (%p18) target = $region8
    $region5: #{tpu_custom_call.1} parent=1 // loop_body
      %s22 = ssub.s32 %s17, 1
      %s23 = ssub.s32 %s17, 2
      %s24 = sadd.s32 %s17, 1
      %s25 = ssub.s32 %s17, %s24
      %p26 = scmp.eq.s32.totalorder %s25, 0
      %s28 = sadd.s32 %s27, 1
      %s29 = scalar_select %p26, %s27, %s28
      %p32 = pneg %p26
      %p33 = scmp.eq.s32.totalorder %s17, 1
      %p34 = por %p32, %p33
      %p35 = scmp.ne.s32.totalorder %s27, %s30
      %p36 = scmp.eq.s32.totalorder %s17, 0
      %p37 = por %p35, %p36
      %p38 = scmp.ne.s32.totalorder %s27, %s30
      %p39 = scmp.eq.s32.totalorder %s22, 1
      %p40 = por %p38, %p39
      %p41 = scmp.ne.s32.totalorder %s30, %s31
      %p42 = scmp.eq.s32.totalorder %s22, 0
      %p43 = por %p41, %p42
      %p44 = scmp.ne.s32.totalorder %s30, %s31
      %p45 = scmp.eq.s32.totalorder %s23, 1
      %p46 = por %p44, %p45
      %p48 = scmp.ne.s32.totalorder %s31, %s47
      %p49 = scmp.eq.s32.totalorder %s23, 0
      %p50 = por %p48, %p49
      %s51 = ssub.s32 %s17, %s24
      %p52 = scmp.eq.s32.totalorder %s51, 0
      %s54 = sadd.s32 %s53, 1
      %s55 = scalar_select %p52, %s53, %s54
      %p58 = pneg %p52
      %p59 = scmp.eq.s32.totalorder %s17, 1
      %p60 = por %p58, %p59
      %p61 = scmp.ne.s32.totalorder %s53, %s56
      %p62 = scmp.eq.s32.totalorder %s17, 0
      %p63 = por %p61, %p62
      %p64 = scmp.ne.s32.totalorder %s53, %s56
      %p65 = scmp.eq.s32.totalorder %s22, 1
      %p66 = por %p64, %p65
      %p67 = scmp.ne.s32.totalorder %s56, %s57
      %p68 = scmp.eq.s32.totalorder %s22, 0
      %p69 = por %p67, %p68
      %p70 = scmp.ne.s32.totalorder %s56, %s57
      %p71 = scmp.eq.s32.totalorder %s23, 1
      %p72 = por %p70, %p71
      %p74 = scmp.ne.s32.totalorder %s57, %s73
      %p75 = scmp.eq.s32.totalorder %s23, 0
      %p76 = por %p74, %p75
      %s77 = ssub.s32 %s17, %s24
      %p78 = scmp.eq.s32.totalorder %s77, 0
      %s80 = sadd.s32 %s79, 1
      %s81 = scalar_select %p78, %s79, %s80
      %p84 = pneg %p78
      %p85 = scmp.eq.s32.totalorder %s17, 1
      %p86 = por %p84, %p85
      %p87 = scmp.ne.s32.totalorder %s79, %s82
      %p88 = scmp.eq.s32.totalorder %s17, 0
      %p89 = por %p87, %p88
      %p90 = scmp.ne.s32.totalorder %s79, %s82
      %p91 = scmp.eq.s32.totalorder %s22, 1
      %p92 = por %p90, %p91
      %p93 = scmp.ne.s32.totalorder %s82, %s83
      %p94 = scmp.eq.s32.totalorder %s22, 0
      %p95 = por %p93, %p94
      %p96 = scmp.ne.s32.totalorder %s82, %s83
      %p97 = scmp.eq.s32.totalorder %s23, 1
      %p98 = por %p96, %p97
      %p100 = scmp.ne.s32.totalorder %s83, %s99
      %p101 = scmp.eq.s32.totalorder %s23, 0
      %p102 = por %p100, %p101
      %p103 = scmp.le.s32.totalorder 1, %s17
      %p104 = scmp.lt.s32.totalorder %s17, 3
      %p105 = pnand %p103, %p104
      %p106 = pneg %p105
      // Predicated region
      $region9: #{tpu_custom_call.1} parent=5 // pred_check
        _
      $region10: #{tpu_custom_call.1} parent=5 // pred_check_branch
        %108 = sbr.rel (%p105) target = $region12
      $region11: #{tpu_custom_call.1} parent=5 // pred_region
        %s109 = ssub.s32 %s17, 1
      $region12: #{tpu_custom_call.1} parent=5 // pred_fallthru
        _
      %p110 = scmp.lt.s32.totalorder %s17, 2
      // Predicated region
      $region13: #{tpu_custom_call.1} parent=5 // pred_check
        %p111 = pneg %p110
      $region14: #{tpu_custom_call.1} parent=5 // pred_check_branch
        %113 = sbr.rel (%p111) target = $region16
      $region15: #{tpu_custom_call.1} parent=5 // pred_region
        // Predicated region
        $region17: #{tpu_custom_call.1} parent=15 // pred_check
          %p114 = pneg %p37
        $region18: #{tpu_custom_call.1} parent=15 // pred_check_branch
          %116 = sbr.rel (%p114) target = $region20
        $region19: #{tpu_custom_call.1} parent=15 // pred_region
          %s117 = sand.u32 %s27, 1
          %s118 = scalar_lea.sflag [#allocation3], %s117
          %s119 = sand.u32 %s27, 1
          %s120 = smul.addr %s119, 8
          %s121 = scalar_lea.vmem [#allocation2], %s120
          %s123 = ssub.s32 128, 128
          %124 = vsyncadd %s118, %s123
          %s125 = smul.addr %s17, 128
          %s126 = scalar_lea.hbm %s0, %s125
          %s128 = sshll.u32 %s121, 4
          %s129 = int_to_ptr.vmem [resolvable:$true] %s128
          %131 = dma.hbm_to_vmem [thread:$0]  %s126, 128, %s129, %s118
        $region20: #{tpu_custom_call.1} parent=15 // pred_fallthru
          _
        // Predicated region
        $region21: #{tpu_custom_call.1} parent=15 // pred_check
          %p132 = pneg %p63
        $region22: #{tpu_custom_call.1} parent=15 // pred_check_branch
          %134 = sbr.rel (%p132) target = $region24
        $region23: #{tpu_custom_call.1} parent=15 // pred_region
          %s135 = sand.u32 %s53, 1
          %s136 = scalar_lea.sflag [#allocation6], %s135
          %s137 = sand.u32 %s53, 1
          %s138 = smul.addr %s137, 8
          %s139 = scalar_lea.vmem [#allocation5], %s138
          %s141 = ssub.s32 128, 128
          %142 = vsyncadd %s136, %s141
          %s143 = smul.addr %s17, 128
          %s144 = scalar_lea.hbm %s1, %s143
          %s146 = sshll.u32 %s139, 4
          %s147 = int_to_ptr.vmem [resolvable:$true] %s146
          %149 = dma.hbm_to_vmem [thread:$0]  %s144, 128, %s147, %s136
        $region24: #{tpu_custom_call.1} parent=15 // pred_fallthru
          _
      $region16: #{tpu_custom_call.1} parent=5 // pred_fallthru
        _
      %p150 = scmp.le.s32.totalorder 1, %s17
      %p151 = scmp.lt.s32.totalorder %s17, 3
      %p152 = pnand %p150, %p151
      %p153 = pneg %p152
      // Predicated region
      $region25: #{tpu_custom_call.1} parent=5 // pred_check
        _
      $region26: #{tpu_custom_call.1} parent=5 // pred_check_branch
        %155 = sbr.rel (%p152) target = $region28
      $region27: #{tpu_custom_call.1} parent=5 // pred_region
        %s156 = ssub.s32 %s17, 1
        %s157 = sand.u32 %s30, 1
        %s158 = scalar_lea.sflag [#allocation3], %s157
        %s159 = sand.u32 %s30, 1
        %s160 = smul.addr %s159, 8
        %s161 = scalar_lea.vmem [#allocation2], %s160
        // Predicated region
        $region29: #{tpu_custom_call.1} parent=27 // pred_check
          %p162 = pneg %p43
        $region30: #{tpu_custom_call.1} parent=27 // pred_check_branch
          %164 = sbr.rel (%p162) target = $region32
        $region31: #{tpu_custom_call.1} parent=27 // pred_region
          %165 = dma.done %s158, 128
        $region32: #{tpu_custom_call.1} parent=27 // pred_fallthru
          _
        %s166 = sand.u32 %s56, 1
        %s167 = scalar_lea.sflag [#allocation6], %s166
        %s168 = sand.u32 %s56, 1
        %s169 = smul.addr %s168, 8
        %s170 = scalar_lea.vmem [#allocation5], %s169
        // Predicated region
        $region33: #{tpu_custom_call.1} parent=27 // pred_check
          %p171 = pneg %p69
        $region34: #{tpu_custom_call.1} parent=27 // pred_check_branch
          %173 = sbr.rel (%p171) target = $region36
        $region35: #{tpu_custom_call.1} parent=27 // pred_region
          %174 = dma.done %s167, 128
        $region36: #{tpu_custom_call.1} parent=27 // pred_fallthru
          _
        %s175 = sand.u32 %s30, 1
        %s176 = scalar_lea.sflag [#allocation3], %s175
        %s177 = sand.u32 %s30, 1
        %s178 = smul.addr %s177, 8
        %s179 = scalar_lea.vmem [#allocation2], %s178
        %p180 = pneg %p43
        %p181 = pneg %p40
        %s182 = sand.u32 %s56, 1
        %s183 = scalar_lea.sflag [#allocation6], %s182
        %s184 = sand.u32 %s56, 1
        %s185 = smul.addr %s184, 8
        %s186 = scalar_lea.vmem [#allocation5], %s185
        %p187 = pneg %p69
        %p188 = pneg %p66
        %p189 = pneg %p95
        %p190 = pneg %p92
        %s191 = sand.u32 %s82, 1
        %s192 = scalar_lea.sflag [#allocation4], %s191
        %s193 = sand.u32 %s82, 1
        %s194 = scalar_lea.vmem [#allocation7], %s193
        %v195 = vld [vmem:[%s161] sm:$0xff]
        %v196 = vld [vmem:[%s170] sm:$0xff]
        %v197 = vrot.slane %v195, 4
        %v198 = vadd.f32 %v195, %v197
        %v199 = vrot.slane %v198, 2
        %v200 = vadd.f32 %v198, %v199
        %v201 = vrot.slane %v200, 1
        %v202 = vadd.f32 %v200, %v201
        %v203 = vrcp.pop 8.0
        %v204 = vmul.f32 %v202, %v203
        %v205 = vrot.slane %v196, 4
        %v206 = vadd.f32 %v196, %v205
        %v207 = vrot.slane %v206, 2
        %v208 = vadd.f32 %v206, %v207
        %v209 = vrot.slane %v208, 1
        %v210 = vadd.f32 %v208, %v209
        %v211 = vmul.f32 %v210, %v203
        %v212 = vsub.f32 %v204, %v211
        %v213 = vmul.f32 %v212, %v212
        %214 = vst [vmem:[%s194] sm:$0x1] %v213
        %s215 = sand.u32 %s82, 1
        %s216 = scalar_lea.sflag [#allocation4], %s215
        %s217 = sand.u32 %s82, 1
        %s218 = scalar_lea.vmem [#allocation7], %s217
        // Predicated region
        $region37: #{tpu_custom_call.1} parent=27 // pred_check
          %p219 = pneg %p92
        $region38: #{tpu_custom_call.1} parent=27 // pred_check_branch
          %221 = sbr.rel (%p219) target = $region40
        $region39: #{tpu_custom_call.1} parent=27 // pred_region
          %s223 = ssub.s32 16, 16
          %224 = vsyncadd %s216, %s223
          %s225 = smul.addr %s22, 16
          %s226 = scalar_lea.hbm %s2, %s225
          %s228 = sshll.u32 %s218, 4
          %s229 = int_to_ptr.vmem [resolvable:$true] %s228
          %231 = dma.vmem_to_hbm [thread:$0]  %s229, 16, %s226, %s216
        $region40: #{tpu_custom_call.1} parent=27 // pred_fallthru
          _
      $region28: #{tpu_custom_call.1} parent=5 // pred_fallthru
        _
      %p232 = scmp.le.s32.totalorder 2, %s17
      // Predicated region
      $region41: #{tpu_custom_call.1} parent=5 // pred_check
        %p233 = pneg %p232
      $region42: #{tpu_custom_call.1} parent=5 // pred_check_branch
        %235 = sbr.rel (%p233) target = $region44
      $region43: #{tpu_custom_call.1} parent=5 // pred_region
        %s236 = ssub.s32 %s17, 2
        // Predicated region
        $region45: #{tpu_custom_call.1} parent=43 // pred_check
          %p237 = pneg %p98
        $region46: #{tpu_custom_call.1} parent=43 // pred_check_branch
          %239 = sbr.rel (%p237) target = $region48
        $region47: #{tpu_custom_call.1} parent=43 // pred_region
          %s240 = sand.u32 %s83, 1
          %s241 = scalar_lea.sflag [#allocation4], %s240
          %s242 = sand.u32 %s83, 1
          %s243 = scalar_lea.vmem [#allocation7], %s242
          %244 = dma.done %s241, 16
        $region48: #{tpu_custom_call.1} parent=43 // pred_fallthru
          _
      $region44: #{tpu_custom_call.1} parent=5 // pred_fallthru
        _
    $region6: #{tpu_custom_call.1} parent=1 // loop_footer
      %s21 = sadd.s32 1, %s17
    $region7: #{tpu_custom_call.1} parent=1 // loop_footer_branch
      %16 = sbr.rel target = $region3
    $region8: #{tpu_custom_call.1} parent=1 // loop_exit
      _
    %245 = vsyncpa [#allocation3], 1
    %s246 = scalar_lea.sflag [#allocation3], 1
    %247 = vsyncpa %s246, 1
    %248 = vsyncpa [#allocation6], 1
    %s249 = scalar_lea.sflag [#allocation6], 1
    %250 = vsyncpa %s249, 1
    %251 = vsyncpa [#allocation4], 1
    %s252 = scalar_lea.sflag [#allocation4], 1
    %253 = vsyncpa %s252, 1

</llo_original>
